<compile_context>
chip_gen: v5e
topology: v5e:2x2
jax: 0.10.0
libtpu: 0.0.40
codegen_flags: <defaults>
</compile_context>

<pallas_src>
import functools

import jax
import jax.numpy as jnp
from jax.experimental import pallas as pl
from jax.experimental.pallas import tpu as pltpu


def _dirichlet_kernel(fd_ref, fh_ref, fw_ref, o_ref, *, inv_hw, inv_dw, inv_dh, weight):
    # f32 math for all reductions (v5e VPU has no bf16 path anyway).
    fd = fd_ref[0].astype(jnp.float32)   # (2, H*W): d=0 and d=D-1 faces
    fh = fh_ref[0].astype(jnp.float32)   # (2, D*W): h=0 and h=H-1 faces
    fw = fw_ref[0].astype(jnp.float32)   # (2, D*H): w=0 and w=W-1 faces

    contrib = (jnp.sum(fd * fd) * inv_hw
               + jnp.sum(fh * fh) * inv_dw
               + jnp.sum(fw * fw) * inv_dh) * weight

    # Per-batch partial (no cross-grid accumulation); summed in the wrapper.
    o_ref[...] = jnp.zeros_like(o_ref) + contrib


@functools.partial(jax.jit, static_argnums=1)
def dirichlet_boundary_loss(output, bound_weight):
    """output: [N, C, D, H, W]; returns bound_weight * sum of the 6 face MSEs."""
    N, C, D, H, W = output.shape

    # Slice only boundary faces of channel 0 (face bytes only — no full-slab copy).
    f_d = jnp.stack([output[:, 0, 0, :, :], output[:, 0, D - 1, :, :]],
                    axis=1).reshape(N, 2, H * W)
    f_h = jnp.stack([output[:, 0, :, 0, :], output[:, 0, :, H - 1, :]],
                    axis=1).reshape(N, 2, D * W)
    f_w = jnp.stack([output[:, 0, :, :, 0], output[:, 0, :, :, W - 1]],
                    axis=1).reshape(N, 2, D * H)

    kernel = functools.partial(
        _dirichlet_kernel,
        inv_hw=1.0 / (N * H * W),
        inv_dw=1.0 / (N * D * W),
        inv_dh=1.0 / (N * D * H),
        weight=float(bound_weight),
    )

    partials = pl.pallas_call(
        kernel,
        out_shape=jax.ShapeDtypeStruct((N, 1, 1), jnp.float32),
        grid_spec=pltpu.PrefetchScalarGridSpec(
            num_scalar_prefetch=0,
            grid=(N,),
            in_specs=[
                pl.BlockSpec((1, 2, H * W), lambda b: (b, 0, 0)),
                pl.BlockSpec((1, 2, D * W), lambda b: (b, 0, 0)),
                pl.BlockSpec((1, 2, D * H), lambda b: (b, 0, 0)),
            ],
            out_specs=pl.BlockSpec((1, 1, 1), lambda b: (b, 0, 0)),
        ),
        compiler_params=pltpu.CompilerParams(
            dimension_semantics=("parallel",),   # independent per-batch partials
        ),
    )(f_d, f_h, f_w)

    return jnp.sum(partials)


def _reference_loss(output, bound_weight):
    x = output[:, 0].astype(jnp.float32)
    loss = jnp.mean(x[:, -1, :, :] ** 2)
    loss += jnp.mean(x[:, :, 0, :] ** 2)
    loss += jnp.mean(x[:, :, -1, :] ** 2)
    loss += jnp.mean(x[:, 0, :, :] ** 2)
    loss += jnp.mean(x[:, :, :, 0] ** 2)
    loss += jnp.mean(x[:, :, :, -1] ** 2)
    return loss * bound_weight


if __name__ == "__main__":
    key = jax.random.PRNGKey(0)
    N, C, D, H, W = 2, 4, 8, 16, 16
    bound_weight = 0.5  # deterministic module "parameter"

    output = jax.random.normal(key, (N, C, D, H, W), dtype=jnp.float32)

    loss = dirichlet_boundary_loss(output, bound_weight)
    loss = jax.block_until_ready(loss)

    ref = jax.block_until_ready(_reference_loss(output, bound_weight))
    assert jnp.allclose(loss, ref, rtol=1e-5, atol=1e-6), (loss, ref)

    print("KERNEL_OK")
</pallas_src>

<mosaic_0001>
module attributes {stable_mosaic.version = 11 : i64} {
  func.func @_dirichlet_kernel(%arg0: i32, %arg1: memref<1x2x256xf32, #tpu.memory_space<vmem>>, %arg2: memref<1x2x128xf32, #tpu.memory_space<vmem>>, %arg3: memref<1x2x128xf32, #tpu.memory_space<vmem>>, %arg4: memref<1x1x1xf32, #tpu.memory_space<vmem>>) attributes {dimension_semantics = [#tpu.dimension_semantics<parallel>], iteration_bounds = array<i64: 2>, scalar_prefetch = 0 : i64, scratch_operands = 0 : i64, tpu.core_type = #tpu.core_type<tc>, window_params = [{transform_indices = @transform_0, window_bounds = array<i64: 1, 2, 256>}, {transform_indices = @transform_1, window_bounds = array<i64: 1, 2, 128>}, {transform_indices = @transform_2, window_bounds = array<i64: 1, 2, 128>}, {transform_indices = @transform_3, window_bounds = array<i64: 1, 1, 1>}]} {
    %c0 = arith.constant 0 : index
    %c0_0 = arith.constant 0 : index
    %c0_1 = arith.constant 0 : index
    %0 = vector.load %arg1[%c0, %c0_0, %c0_1] : memref<1x2x256xf32, #tpu.memory_space<vmem>>, vector<1x2x256xf32>
    %1 = vector.shape_cast %0 : vector<1x2x256xf32> to vector<2x256xf32>
    %c0_2 = arith.constant 0 : index
    %c0_3 = arith.constant 0 : index
    %c0_4 = arith.constant 0 : index
    %2 = vector.load %arg2[%c0_2, %c0_3, %c0_4] : memref<1x2x128xf32, #tpu.memory_space<vmem>>, vector<1x2x128xf32>
    %3 = vector.shape_cast %2 : vector<1x2x128xf32> to vector<2x128xf32>
    %c0_5 = arith.constant 0 : index
    %c0_6 = arith.constant 0 : index
    %c0_7 = arith.constant 0 : index
    %4 = vector.load %arg3[%c0_5, %c0_6, %c0_7] : memref<1x2x128xf32, #tpu.memory_space<vmem>>, vector<1x2x128xf32>
    %5 = vector.shape_cast %4 : vector<1x2x128xf32> to vector<2x128xf32>
    %6 = arith.mulf %1, %1 : vector<2x256xf32>
    %7 = vector.shape_cast %6 : vector<2x256xf32> to vector<1x2x256xf32>
    %cst = arith.constant dense<0.000000e+00> : vector<1xf32>
    %8 = vector.multi_reduction <add>, %7, %cst [1, 2] : vector<1x2x256xf32> to vector<1xf32>
    %9 = vector.shape_cast %8 : vector<1xf32> to vector<1x1x1xf32>
    %10 = vector.extract %9[0, 0, 0] : f32 from vector<1x1x1xf32>
    %cst_8 = arith.constant 0.001953125 : f32
    %11 = arith.mulf %10, %cst_8 : f32
    %12 = arith.mulf %3, %3 : vector<2x128xf32>
    %13 = vector.shape_cast %12 : vector<2x128xf32> to vector<1x2x128xf32>
    %cst_9 = arith.constant dense<0.000000e+00> : vector<1xf32>
    %14 = vector.multi_reduction <add>, %13, %cst_9 [1, 2] : vector<1x2x128xf32> to vector<1xf32>
    %15 = vector.shape_cast %14 : vector<1xf32> to vector<1x1x1xf32>
    %16 = vector.extract %15[0, 0, 0] : f32 from vector<1x1x1xf32>
    %cst_10 = arith.constant 3.906250e-03 : f32
    %17 = arith.mulf %16, %cst_10 : f32
    %18 = arith.addf %11, %17 : f32
    %19 = arith.mulf %5, %5 : vector<2x128xf32>
    %20 = vector.shape_cast %19 : vector<2x128xf32> to vector<1x2x128xf32>
    %cst_11 = arith.constant dense<0.000000e+00> : vector<1xf32>
    %21 = vector.multi_reduction <add>, %20, %cst_11 [1, 2] : vector<1x2x128xf32> to vector<1xf32>
    %22 = vector.shape_cast %21 : vector<1xf32> to vector<1x1x1xf32>
    %23 = vector.extract %22[0, 0, 0] : f32 from vector<1x1x1xf32>
    %cst_12 = arith.constant 3.906250e-03 : f32
    %24 = arith.mulf %23, %cst_12 : f32
    %25 = arith.addf %18, %24 : f32
    %cst_13 = arith.constant 5.000000e-01 : f32
    %26 = arith.mulf %25, %cst_13 : f32
    %cst_14 = arith.constant 0.000000e+00 : f32
    %27 = vector.broadcast %cst_14 : f32 to vector<1x1x1xf32>
    %28 = vector.broadcast %26 : f32 to vector<1x1x1xf32>
    %29 = arith.addf %27, %28 : vector<1x1x1xf32>
    %c0_15 = arith.constant 0 : index
    %c0_16 = arith.constant 0 : index
    %c0_17 = arith.constant 0 : index
    %30 = vector.load %arg4[%c0_15, %c0_16, %c0_17] : memref<1x1x1xf32, #tpu.memory_space<vmem>>, vector<1x1x1xf32>
    tpu.vector_store %arg4[%c0_15, %c0_16, %c0_17], %29 {strides = array<i32>} : memref<1x1x1xf32, #tpu.memory_space<vmem>>, vector<1x1x1xf32>,
    return
  }
  func.func @transform_0(%arg0: i32) -> (i32, i32, i32) {
    %c0_i32 = arith.constant 0 : i32
    %c0_i32_0 = arith.constant 0 : i32
    %c0_i32_1 = arith.constant 0 : i32
    return %arg0, %c0_i32, %c0_i32_0 : i32, i32, i32
  }
  func.func @transform_1(%arg0: i32) -> (i32, i32, i32) {
    %c0_i32 = arith.constant 0 : i32
    %c0_i32_0 = arith.constant 0 : i32
    %c0_i32_1 = arith.constant 0 : i32
    return %arg0, %c0_i32, %c0_i32_0 : i32, i32, i32
  }
  func.func @transform_2(%arg0: i32) -> (i32, i32, i32) {
    %c0_i32 = arith.constant 0 : i32
    %c0_i32_0 = arith.constant 0 : i32
    %c0_i32_1 = arith.constant 0 : i32
    return %arg0, %c0_i32, %c0_i32_0 : i32, i32, i32
  }
  func.func @transform_3(%arg0: i32) -> (i32, i32, i32) {
    %c0_i32 = arith.constant 0 : i32
    %c0_i32_0 = arith.constant 0 : i32
    %c0_i32_1 = arith.constant 0 : i32
    return %arg0, %c0_i32, %c0_i32_0 : i32, i32, i32
  }
}

</mosaic_0001>

<llo_original>
// kernel: dirichlet_boundary_loss.1
$region0: #{dirichlet_boundary_loss.1}
  #allocation0 [shape = 'u32[]', space=smem, size = 0x4, offset = 0x4, fixed_abs, tag = 'smem constant byte address 0x4 - core index']
  #allocation1 [shape = 'u32[72,128]{1,0:T(1,128)}', space=vmem, size = 0x9000, scoped, tag = 'internal scratch']
  %s0 = inlined_call_operand.vmem [shape: f32[2,2,256], index: 0, kind: input, shape index: {}]
  %s1 = inlined_call_operand.vmem [shape: f32[2,2,128], index: 1, kind: input, shape index: {}]
  %s2 = inlined_call_operand.vmem [shape: f32[2,2,128], index: 2, kind: input, shape index: {}]
  %s3 = inlined_call_operand.vmem [shape: f32[2,1,1], index: 3, kind: output, shape index: {}]
  %s4 = sld [smem:[#allocation0]]
  $region45: #{dirichlet_boundary_loss.1} parent=0
    _
  %s6 = ssub.s32 1, %s4
  %s7 = scalar_select 0, %s6, %s4
  loop: start=0, step=1, limit=4
  $region2: #{dirichlet_boundary_loss.1} parent=0 // loop_pre_header
    _
  $region3: #{dirichlet_boundary_loss.1} parent=0 // loop_header
    %s9 = sphi 0, %s13
    %p10 = scmp.ge.s32.totalorder %s9, 4
    %s19 = sphi 0, %s21
    %s22 = sphi 0, %s19
    %s23 = sphi 0, %s22
    %s39 = sphi 0, %s23
    %s45 = sphi 0, %s47
    %s48 = sphi 0, %s45
    %s49 = sphi 0, %s48
    %s65 = sphi 0, %s49
    %s71 = sphi 0, %s73
    %s74 = sphi 0, %s71
    %s75 = sphi 0, %s74
    %s91 = sphi 0, %s75
    %s97 = sphi 0, %s99
    %s100 = sphi 0, %s97
    %s101 = sphi 0, %s100
    %s117 = sphi 0, %s101
  $region4: #{dirichlet_boundary_loss.1} parent=0 // loop_header_branch
    %12 = sbr.rel (%p10) target = $region8
  $region5: #{dirichlet_boundary_loss.1} parent=0 // loop_body
    %s14 = ssub.s32 %s9, 1
    %s15 = ssub.s32 %s9, 2
    %s16 = sadd.s32 %s9, 1
    %s17 = ssub.s32 %s9, %s16
    %p18 = scmp.eq.s32.totalorder %s17, 0
    %s20 = sadd.s32 %s19, 1
    %s21 = scalar_select %p18, %s19, %s20
    %p24 = pneg %p18
    %p25 = scmp.eq.s32.totalorder %s9, 1
    %p26 = por %p24, %p25
    %p27 = scmp.ne.s32.totalorder %s19, %s22
    %p28 = scmp.eq.s32.totalorder %s9, 0
    %p29 = por %p27, %p28
    %p30 = scmp.ne.s32.totalorder %s19, %s22
    %p31 = scmp.eq.s32.totalorder %s14, 1
    %p32 = por %p30, %p31
    %p33 = scmp.ne.s32.totalorder %s22, %s23
    %p34 = scmp.eq.s32.totalorder %s14, 0
    %p35 = por %p33, %p34
    %p36 = scmp.ne.s32.totalorder %s22, %s23
    %p37 = scmp.eq.s32.totalorder %s15, 1
    %p38 = por %p36, %p37
    %p40 = scmp.ne.s32.totalorder %s23, %s39
    %p41 = scmp.eq.s32.totalorder %s15, 0
    %p42 = por %p40, %p41
    %s43 = ssub.s32 %s9, %s16
    %p44 = scmp.eq.s32.totalorder %s43, 0
    %s46 = sadd.s32 %s45, 1
    %s47 = scalar_select %p44, %s45, %s46
    %p50 = pneg %p44
    %p51 = scmp.eq.s32.totalorder %s9, 1
    %p52 = por %p50, %p51
    %p53 = scmp.ne.s32.totalorder %s45, %s48
    %p54 = scmp.eq.s32.totalorder %s9, 0
    %p55 = por %p53, %p54
    %p56 = scmp.ne.s32.totalorder %s45, %s48
    %p57 = scmp.eq.s32.totalorder %s14, 1
    %p58 = por %p56, %p57
    %p59 = scmp.ne.s32.totalorder %s48, %s49
    %p60 = scmp.eq.s32.totalorder %s14, 0
    %p61 = por %p59, %p60
    %p62 = scmp.ne.s32.totalorder %s48, %s49
    %p63 = scmp.eq.s32.totalorder %s15, 1
    %p64 = por %p62, %p63
    %p66 = scmp.ne.s32.totalorder %s49, %s65
    %p67 = scmp.eq.s32.totalorder %s15, 0
    %p68 = por %p66, %p67
    %s69 = ssub.s32 %s9, %s16
    %p70 = scmp.eq.s32.totalorder %s69, 0
    %s72 = sadd.s32 %s71, 1
    %s73 = scalar_select %p70, %s71, %s72
    %p76 = pneg %p70
    %p77 = scmp.eq.s32.totalorder %s9, 1
    %p78 = por %p76, %p77
    %p79 = scmp.ne.s32.totalorder %s71, %s74
    %p80 = scmp.eq.s32.totalorder %s9, 0
    %p81 = por %p79, %p80
    %p82 = scmp.ne.s32.totalorder %s71, %s74
    %p83 = scmp.eq.s32.totalorder %s14, 1
    %p84 = por %p82, %p83
    %p85 = scmp.ne.s32.totalorder %s74, %s75
    %p86 = scmp.eq.s32.totalorder %s14, 0
    %p87 = por %p85, %p86
    %p88 = scmp.ne.s32.totalorder %s74, %s75
    %p89 = scmp.eq.s32.totalorder %s15, 1
    %p90 = por %p88, %p89
    %p92 = scmp.ne.s32.totalorder %s75, %s91
    %p93 = scmp.eq.s32.totalorder %s15, 0
    %p94 = por %p92, %p93
    %s95 = ssub.s32 %s9, %s16
    %p96 = scmp.eq.s32.totalorder %s95, 0
    %s98 = sadd.s32 %s97, 1
    %s99 = scalar_select %p96, %s97, %s98
    %p102 = pneg %p96
    %p103 = scmp.eq.s32.totalorder %s9, 1
    %p104 = por %p102, %p103
    %p105 = scmp.ne.s32.totalorder %s97, %s100
    %p106 = scmp.eq.s32.totalorder %s9, 0
    %p107 = por %p105, %p106
    %p108 = scmp.ne.s32.totalorder %s97, %s100
    %p109 = scmp.eq.s32.totalorder %s14, 1
    %p110 = por %p108, %p109
    %p111 = scmp.ne.s32.totalorder %s100, %s101
    %p112 = scmp.eq.s32.totalorder %s14, 0
    %p113 = por %p111, %p112
    %p114 = scmp.ne.s32.totalorder %s100, %s101
    %p115 = scmp.eq.s32.totalorder %s15, 1
    %p116 = por %p114, %p115
    %p118 = scmp.ne.s32.totalorder %s101, %s117
    %p119 = scmp.eq.s32.totalorder %s15, 0
    %p120 = por %p118, %p119
    %p121 = scmp.le.s32.totalorder 1, %s9
    %p122 = scmp.lt.s32.totalorder %s9, 3
    %p123 = pnand %p121, %p122
    %p124 = pneg %p123
    // Predicated region
    $region9: #{dirichlet_boundary_loss.1} parent=5 // pred_check
      _
    $region10: #{dirichlet_boundary_loss.1} parent=5 // pred_check_branch
      %126 = sbr.rel (%p123) target = $region12
    $region11: #{dirichlet_boundary_loss.1} parent=5 // pred_region
      %s127 = ssub.s32 %s9, 1
    $region12: #{dirichlet_boundary_loss.1} parent=5 // pred_fallthru
      _
    %p128 = scmp.lt.s32.totalorder %s9, 2
    // Predicated region
    $region13: #{dirichlet_boundary_loss.1} parent=5 // pred_check
      %p129 = pneg %p128
    $region14: #{dirichlet_boundary_loss.1} parent=5 // pred_check_branch
      %131 = sbr.rel (%p129) target = $region16
    $region15: #{dirichlet_boundary_loss.1} parent=5 // pred_region
      // Predicated region
      $region17: #{dirichlet_boundary_loss.1} parent=15 // pred_check
        %p132 = pneg %p29
      $region18: #{dirichlet_boundary_loss.1} parent=15 // pred_check_branch
        %134 = sbr.rel (%p132) target = $region20
      $region19: #{dirichlet_boundary_loss.1} parent=15 // pred_region
        %p135 = scmp.lt.s32.totalorder %s9, 1
        %s136 = scalar_select %p135, %s9, 1
        %s137 = smul.addr %s136, 2
        %s138 = smul.addr %s137, 2
        %s139 = scalar_lea.vmem %s0, %s138
      $region20: #{dirichlet_boundary_loss.1} parent=15 // pred_fallthru
        _
      // Predicated region
      $region21: #{dirichlet_boundary_loss.1} parent=15 // pred_check
        %p140 = pneg %p55
      $region22: #{dirichlet_boundary_loss.1} parent=15 // pred_check_branch
        %142 = sbr.rel (%p140) target = $region24
      $region23: #{dirichlet_boundary_loss.1} parent=15 // pred_region
        %p143 = scmp.lt.s32.totalorder %s9, 1
        %s144 = scalar_select %p143, %s9, 1
        %s145 = smul.addr %s144, 2
        %s146 = scalar_lea.vmem %s1, %s145
      $region24: #{dirichlet_boundary_loss.1} parent=15 // pred_fallthru
        _
      // Predicated region
      $region25: #{dirichlet_boundary_loss.1} parent=15 // pred_check
        %p147 = pneg %p81
      $region26: #{dirichlet_boundary_loss.1} parent=15 // pred_check_branch
        %149 = sbr.rel (%p147) target = $region28
      $region27: #{dirichlet_boundary_loss.1} parent=15 // pred_region
        %p150 = scmp.lt.s32.totalorder %s9, 1
        %s151 = scalar_select %p150, %s9, 1
        %s152 = smul.addr %s151, 2
        %s153 = scalar_lea.vmem %s2, %s152
      $region28: #{dirichlet_boundary_loss.1} parent=15 // pred_fallthru
        _
    $region16: #{dirichlet_boundary_loss.1} parent=5 // pred_fallthru
      _
    %p154 = scmp.le.s32.totalorder 1, %s9
    %p155 = scmp.lt.s32.totalorder %s9, 3
    %p156 = pnand %p154, %p155
    %p157 = pneg %p156
    // Predicated region
    $region29: #{dirichlet_boundary_loss.1} parent=5 // pred_check
      _
    $region30: #{dirichlet_boundary_loss.1} parent=5 // pred_check_branch
      %159 = sbr.rel (%p156) target = $region32
    $region31: #{dirichlet_boundary_loss.1} parent=5 // pred_region
      %s160 = ssub.s32 %s9, 1
      %p161 = scmp.lt.s32.totalorder %s14, 1
      %s162 = scalar_select %p161, %s14, 1
      %s163 = smul.addr %s162, 2
      %s164 = smul.addr %s163, 2
      %s165 = scalar_lea.vmem %s0, %s164
      %p166 = pneg %p35
      %p167 = pneg %p32
      %p168 = scmp.lt.s32.totalorder %s14, 1
      %s169 = scalar_select %p168, %s14, 1
      %s170 = smul.addr %s169, 2
      %s171 = scalar_lea.vmem %s1, %s170
      %p172 = pneg %p61
      %p173 = pneg %p58
      %p174 = scmp.lt.s32.totalorder %s14, 1
      %s175 = scalar_select %p174, %s14, 1
      %s176 = smul.addr %s175, 2
      %s177 = scalar_lea.vmem %s2, %s176
      %p178 = pneg %p87
      %p179 = pneg %p84
      %p180 = pneg %p113
      %p181 = pneg %p110
      %p182 = scmp.lt.s32.totalorder %s14, 1
      %s183 = scalar_select %p182, %s14, 1
      %s184 = scalar_lea.vmem %s3, %s183
      %p185 = scmp.lt.s32.totalorder %s14, 1
      %s186 = scalar_select %p185, %s14, 1
      %s187 = smul.addr %s186, 2
      %s188 = smul.addr %s187, 2
      %s189 = scalar_lea.vmem %s0, %s188
      %p190 = scmp.lt.s32.totalorder %s14, 1
      %s191 = scalar_select %p190, %s14, 1
      %s192 = smul.addr %s191, 2
      %s193 = scalar_lea.vmem %s1, %s192
      %p194 = scmp.lt.s32.totalorder %s14, 1
      %s195 = scalar_select %p194, %s14, 1
      %s196 = smul.addr %s195, 2
      %s197 = scalar_lea.vmem %s2, %s196
      %p198 = scmp.lt.s32.totalorder %s14, 1
      %s199 = scalar_select %p198, %s14, 1
      %s200 = scalar_lea.vmem %s3, %s199
      %v201 = vld [vmem:[%s189] sm:$0xf]
      %v202 = vld [vmem:[%s193] sm:$0x3]
      %v203 = vld [vmem:[%s197] sm:$0x3]
      %v204 = vmul.f32 %v201, %v201
      %206 = vst [vmem:[#allocation1] ss:$4 sm:$0xff] %v204
      %v207 = vld.sshfl [vmem:[#allocation1] sm:$0xff pattern:$0x73625140]
      %v208 = vld.sshfl [vmem:[#allocation1 + $0x8] sm:$0xff pattern:$0x73625140]
      %vm211 = vcmask 1041408
      %v212 = vsel %vm211, %v207, 0.0
      %v213 = vsel %vm211, %v208, 0.0
      %v214 = vadd.f32 %v212, %v213
      %215 = vadd.xlane.f32.xlu0 %v214
      %v216 = vpop.xlane.xlu0 %215
      %v217 = vrot.slane %v216, 4
      %v218 = vadd.f32 %v216, %v217
      %v219 = vrot.slane %v218, 2
      %v220 = vadd.f32 %v218, %v219
      %v221 = vrot.slane %v220, 1
      %v222 = vadd.f32 %v220, %v221
      %s223 = vtos %v222
      %s224 = smul.f32 %s223, 0.001953125
      %v225 = vmul.f32 %v202, %v202
      %v226 = vsel %vm211, %v225, 0.0
      %227 = vadd.xlane.f32.xlu0 %v226
      %v228 = vpop.xlane.xlu0 %227
      %v229 = vrot.slane %v228, 4
      %v230 = vadd.f32 %v228, %v229
      %v231 = vrot.slane %v230, 2
      %v232 = vadd.f32 %v230, %v231
      %v233 = vrot.slane %v232, 1
      %v234 = vadd.f32 %v232, %v233
      %s235 = vtos %v234
      %s236 = smul.f32 %s235, 0.00390625
      %s237 = sadd.f32 %s224, %s236
      %v238 = vmul.f32 %v203, %v203
      %v239 = vsel %vm211, %v238, 0.0
      %240 = vadd.xlane.f32.xlu0 %v239
      %v241 = vpop.xlane.xlu0 %240
      %v242 = vrot.slane %v241, 4
      %v243 = vadd.f32 %v241, %v242
      %v244 = vrot.slane %v243, 2
      %v245 = vadd.f32 %v243, %v244
      %v246 = vrot.slane %v245, 1
      %v247 = vadd.f32 %v245, %v246
      %s248 = vtos %v247
      %s249 = smul.f32 %s248, 0.00390625
      %s250 = sadd.f32 %s237, %s249
      %s251 = smul.f32 %s250, 0.5
      %v252 = vstv %s251
      %v253 = vadd.f32 %v252, 0.0
      %vm254 = vcmask 0
      %255 = vst.msk [vmem:[%s200] sm:$0x1] %vm254, %v253
      %p256 = scmp.lt.s32.totalorder %s14, 1
      %s257 = scalar_select %p256, %s14, 1
      %s258 = scalar_lea.vmem %s3, %s257
      // Predicated region
      $region33: #{dirichlet_boundary_loss.1} parent=31 // pred_check
        %p259 = pneg %p110
      $region34: #{dirichlet_boundary_loss.1} parent=31 // pred_check_branch
        %261 = sbr.rel (%p259) target = $region36
      $region35: #{dirichlet_boundary_loss.1} parent=31 // pred_region
        _
      $region36: #{dirichlet_boundary_loss.1} parent=31 // pred_fallthru
        _
    $region32: #{dirichlet_boundary_loss.1} parent=5 // pred_fallthru
      _
    %p262 = scmp.le.s32.totalorder 2, %s9
    // Predicated region
    $region37: #{dirichlet_boundary_loss.1} parent=5 // pred_check
      %p263 = pneg %p262
    $region38: #{dirichlet_boundary_loss.1} parent=5 // pred_check_branch
      %265 = sbr.rel (%p263) target = $region40
    $region39: #{dirichlet_boundary_loss.1} parent=5 // pred_region
      %s266 = ssub.s32 %s9, 2
      // Predicated region
      $region41: #{dirichlet_boundary_loss.1} parent=39 // pred_check
        %p267 = pneg %p116
      $region42: #{dirichlet_boundary_loss.1} parent=39 // pred_check_branch
        %269 = sbr.rel (%p267) target = $region44
      $region43: #{dirichlet_boundary_loss.1} parent=39 // pred_region
        %p270 = scmp.lt.s32.totalorder %s15, 1
        %s271 = scalar_select %p270, %s15, 1
        %s272 = scalar_lea.vmem %s3, %s271
      $region44: #{dirichlet_boundary_loss.1} parent=39 // pred_fallthru
        _
    $region40: #{dirichlet_boundary_loss.1} parent=5 // pred_fallthru
      _
  $region6: #{dirichlet_boundary_loss.1} parent=0 // loop_footer
    %s13 = sadd.s32 1, %s9
  $region7: #{dirichlet_boundary_loss.1} parent=0 // loop_footer_branch
    %8 = sbr.rel target = $region3
  $region8: #{dirichlet_boundary_loss.1} parent=0 // loop_exit
    _

</llo_original>
